<compile_context>
chip_gen: v7x
topology: tpu7x:2x2x1
jax: 0.10.0
libtpu: 0.0.40
codegen_flags: <defaults>
</compile_context>

<pallas_src>
import jax
import jax.numpy as jnp
from jax.experimental import pallas as pl
from jax.experimental.pallas import tpu as pltpu

N_MEL = 80  # hard-coded in the original loss (mask.expand(80, ...))


def _loss_kernel(w_ref,                                    # VMEM (Ra, Ca)  guided-attn weight (resident)
                 mel_out_ref, mel_post_ref, mel_tgt_ref,   # VMEM (Rm, Cm)  per-batch mel tiles
                 gate_out_ref, gate_tgt_ref,               # VMEM (Rg, Cg)  per-batch gate tiles
                 align_ref,                                # VMEM (Ra, Ca)  per-batch alignment tile
                 melgate_ref, guided_ref):                 # VMEM (8, 128) f32 per-batch partials
    # ---- mel MSE (reduction='sum') for decoder and postnet outputs --------
    mel_tgt = mel_tgt_ref[...].astype(jnp.float32)
    d1 = mel_out_ref[...].astype(jnp.float32) - mel_tgt
    d2 = mel_post_ref[...].astype(jnp.float32) - mel_tgt
    mel_sum = jnp.sum(d1 * d1 + d2 * d2)

    # ---- BCEWithLogitsLoss (reduction='sum') on the gate logits -----------
    x = gate_out_ref[...].astype(jnp.float32)
    z = gate_tgt_ref[...].astype(jnp.float32)
    bce = jnp.maximum(x, 0.0) - x * z + jnp.log1p(jnp.exp(-jnp.abs(x)))
    gate_sum = jnp.sum(bce)

    # ---- guided attention loss (weight matrix precomputed in wrapper) -----
    a = align_ref[...].astype(jnp.float32)
    guided_sum = jnp.sum(jnp.abs(a * w_ref[...]))

    # per-batch partial sums broadcast into full (8,128) blocks so stores are
    # unmasked; the wrapper reads element [0, 0].
    melgate_ref[...] = jnp.full(melgate_ref.shape, mel_sum + gate_sum, jnp.float32)
    guided_ref[...] = jnp.full(guided_ref.shape, guided_sum, jnp.float32)


def _pack2d(rows, cols):
    """Lane-dense (rows, 128) layout if the flat size allows, else natural 2D."""
    n = rows * cols
    if n % 128 == 0:
        return n // 128, 128
    return rows, cols


@jax.jit
def tacotron2_loss(mel_out, mel_out_postnet, gate_out, alignment,
                   mel_target, gate_target, output_lengths):
    B, n_mel, T = mel_out.shape
    _, t_dec, t_enc = alignment.shape

    mel_rows, mel_cols = _pack2d(n_mel, T)
    gate_rows, gate_cols = _pack2d(1, T)
    al_rows, al_cols = _pack2d(t_dec, t_enc)

    # Free, contiguous reshapes: the sums are order-independent, so this is
    # pure layout plumbing to present lane-dense tiles to the kernel.
    mel_out_r = mel_out.reshape(B, mel_rows, mel_cols)
    mel_post_r = mel_out_postnet.reshape(B, mel_rows, mel_cols)
    mel_tgt_r = mel_target.reshape(B, mel_rows, mel_cols)
    gate_out_r = gate_out.reshape(B, gate_rows, gate_cols)
    gate_tgt_r = gate_target.reshape(B, gate_rows, gate_cols)
    align_r = alignment.reshape(B, al_rows, al_cols)

    # Guided-attention weight, computed once here (hoisted out of the kernel).
    g = 0.2
    n_idx = jnp.arange(t_dec, dtype=jnp.float32)[:, None] / t_dec
    t_idx = jnp.arange(t_enc, dtype=jnp.float32)[None, :] / t_enc
    w = 1.0 - jnp.exp(-((n_idx - t_idx) ** 2) / (2.0 * g * g))
    w = w.reshape(al_rows, al_cols).astype(jnp.float32)

    bytes_accessed = 4 * (3 * B * n_mel * T + 2 * B * T + B * t_dec * t_enc
                          + al_rows * al_cols + 2 * B * 8 * 128)
    cost = pl.CostEstimate(
        flops=8 * B * n_mel * T + 8 * B * T + 4 * B * t_dec * t_enc,
        transcendentals=B * T,
        bytes_accessed=bytes_accessed)

    grid_spec = pltpu.PrefetchScalarGridSpec(
        num_scalar_prefetch=0,
        grid=(B,),
        in_specs=[
            # W: block index never changes -> stays resident, no re-DMA.
            pl.BlockSpec((al_rows, al_cols), lambda b: (0, 0)),
            # per-batch tiles with the batch dim squeezed out of the kernel view
            pl.BlockSpec((None, mel_rows, mel_cols), lambda b: (b, 0, 0)),   # mel_out
            pl.BlockSpec((None, mel_rows, mel_cols), lambda b: (b, 0, 0)),   # mel_out_postnet
            pl.BlockSpec((None, mel_rows, mel_cols), lambda b: (b, 0, 0)),   # mel_target
            pl.BlockSpec((None, gate_rows, gate_cols), lambda b: (b, 0, 0)), # gate_out
            pl.BlockSpec((None, gate_rows, gate_cols), lambda b: (b, 0, 0)), # gate_target
            pl.BlockSpec((None, al_rows, al_cols), lambda b: (b, 0, 0)),     # alignment
        ],
        out_specs=(pl.BlockSpec((None, 8, 128), lambda b: (b, 0, 0)),
                   pl.BlockSpec((None, 8, 128), lambda b: (b, 0, 0))),
    )

    melgate_p, guided_p = pl.pallas_call(
        _loss_kernel,
        out_shape=(jax.ShapeDtypeStruct((B, 8, 128), jnp.float32),
                   jax.ShapeDtypeStruct((B, 8, 128), jnp.float32)),
        grid_spec=grid_spec,
        compiler_params=pltpu.CompilerParams(
            dimension_semantics=("parallel",),
            vmem_limit_bytes=48 * 1024 * 1024),  # headroom under v7x's 64 MiB VMEM
        cost_estimate=cost,
    )(w, mel_out_r, mel_post_r, mel_tgt_r, gate_out_r, gate_tgt_r, align_r)

    # mask.expand(80, B, T_max).sum() == 80 * sum(output_lengths)
    num_non_padding = jnp.float32(N_MEL) * jnp.sum(output_lengths).astype(jnp.float32)
    total_loss = jnp.sum(melgate_p[:, 0, 0]) / num_non_padding
    guided_loss = jnp.sum(guided_p[:, 0, 0]) / jnp.float32(B * t_enc)
    return total_loss, guided_loss


def _reference_loss(mel_out, mel_out_postnet, gate_out, alignment,
                    mel_target, gate_target, output_lengths):
    """Pure-JAX reference mirroring the PyTorch module."""
    mel_loss = (jnp.sum((mel_out - mel_target) ** 2)
                + jnp.sum((mel_out_postnet - mel_target) ** 2))
    x = gate_out.reshape(-1, 1).astype(jnp.float32)
    z = gate_target.reshape(-1, 1).astype(jnp.float32)
    gate_loss = jnp.sum(jnp.maximum(x, 0.0) - x * z
                        + jnp.log1p(jnp.exp(-jnp.abs(x))))
    num_non_padding = N_MEL * jnp.sum(output_lengths).astype(jnp.float32)
    total = (mel_loss + gate_loss) / num_non_padding

    bsz, n_dec, t_enc = alignment.shape
    g = 0.2
    n_idx = jnp.arange(n_dec, dtype=jnp.float32)[:, None] / n_dec
    t_idx = jnp.arange(t_enc, dtype=jnp.float32)[None, :] / t_enc
    w = 1.0 - jnp.exp(-((n_idx - t_idx) ** 2) / (2.0 * g * g))
    guided = jnp.sum(jnp.abs(alignment * w[None])) / (bsz * t_enc)
    return total, guided


if __name__ == "__main__":
    key = jax.random.PRNGKey(0)
    k1, k2, k3, k4, k5, k6 = jax.random.split(key, 6)

    B, T, T_ENC = 2, 16, 8

    mel_out = jax.random.normal(k1, (B, N_MEL, T), dtype=jnp.float32)
    mel_out_postnet = jax.random.normal(k2, (B, N_MEL, T), dtype=jnp.float32)
    mel_target = jax.random.normal(k3, (B, N_MEL, T), dtype=jnp.float32)
    gate_out = jax.random.normal(k4, (B, T), dtype=jnp.float32)
    gate_target = (jax.random.uniform(k5, (B, T)) > 0.7).astype(jnp.float32)
    alignment = jax.nn.softmax(
        jax.random.normal(k6, (B, T, T_ENC), dtype=jnp.float32), axis=-1)
    output_lengths = jnp.array([16, 12], dtype=jnp.int32)

    total, guided = tacotron2_loss(mel_out, mel_out_postnet, gate_out,
                                   alignment, mel_target, gate_target,
                                   output_lengths)
    total = jax.block_until_ready(total)
    guided = jax.block_until_ready(guided)

    ref_total, ref_guided = _reference_loss(mel_out, mel_out_postnet, gate_out,
                                            alignment, mel_target, gate_target,
                                            output_lengths)

    assert jnp.allclose(total, ref_total, rtol=1e-5, atol=1e-5), (total, ref_total)
    assert jnp.allclose(guided, ref_guided, rtol=1e-5, atol=1e-5), (guided, ref_guided)

    # TODO(synk): `.cuda()` / `requires_grad=False` in the original module are
    # device/autograd plumbing with no forward-pass Pallas equivalent.
    print("KERNEL_OK")
</pallas_src>

<mosaic_0001>
module attributes {stable_mosaic.version = 11 : i64} {
  func.func @_loss_kernel(%arg0: i32, %arg1: memref<1x128xf32, #tpu.memory_space<vmem>>, %arg2: memref<1x10x128xf32, #tpu.memory_space<vmem>>, %arg3: memref<1x10x128xf32, #tpu.memory_space<vmem>>, %arg4: memref<1x10x128xf32, #tpu.memory_space<vmem>>, %arg5: memref<1x1x16xf32, #tpu.memory_space<vmem>>, %arg6: memref<1x1x16xf32, #tpu.memory_space<vmem>>, %arg7: memref<1x1x128xf32, #tpu.memory_space<vmem>>, %arg8: memref<1x8x128xf32, #tpu.memory_space<vmem>>, %arg9: memref<1x8x128xf32, #tpu.memory_space<vmem>>) attributes {dimension_semantics = [#tpu.dimension_semantics<parallel>], iteration_bounds = array<i64: 2>, scalar_prefetch = 0 : i64, scratch_operands = 0 : i64, tpu.core_type = #tpu.core_type<tc>, window_params = [{pipeline_mode = #tpu.pipeline_mode<synchronous>, transform_indices = @transform_0, window_bounds = array<i64: 1, 128>}, {transform_indices = @transform_1, window_bounds = array<i64: 1, 10, 128>}, {transform_indices = @transform_2, window_bounds = array<i64: 1, 10, 128>}, {transform_indices = @transform_3, window_bounds = array<i64: 1, 10, 128>}, {transform_indices = @transform_4, window_bounds = array<i64: 1, 1, 16>}, {transform_indices = @transform_5, window_bounds = array<i64: 1, 1, 16>}, {transform_indices = @transform_6, window_bounds = array<i64: 1, 1, 128>}, {transform_indices = @transform_7, window_bounds = array<i64: 1, 8, 128>}, {transform_indices = @transform_8, window_bounds = array<i64: 1, 8, 128>}]} {
    %c0 = arith.constant 0 : index
    %c0_0 = arith.constant 0 : index
    %c0_1 = arith.constant 0 : index
    %0 = vector.load %arg4[%c0, %c0_0, %c0_1] : memref<1x10x128xf32, #tpu.memory_space<vmem>>, vector<1x10x128xf32>
    %1 = vector.shape_cast %0 : vector<1x10x128xf32> to vector<10x128xf32>
    %c0_2 = arith.constant 0 : index
    %c0_3 = arith.constant 0 : index
    %c0_4 = arith.constant 0 : index
    %2 = vector.load %arg2[%c0_2, %c0_3, %c0_4] : memref<1x10x128xf32, #tpu.memory_space<vmem>>, vector<1x10x128xf32>
    %3 = vector.shape_cast %2 : vector<1x10x128xf32> to vector<10x128xf32>
    %4 = arith.subf %3, %1 : vector<10x128xf32>
    %c0_5 = arith.constant 0 : index
    %c0_6 = arith.constant 0 : index
    %c0_7 = arith.constant 0 : index
    %5 = vector.load %arg3[%c0_5, %c0_6, %c0_7] : memref<1x10x128xf32, #tpu.memory_space<vmem>>, vector<1x10x128xf32>
    %6 = vector.shape_cast %5 : vector<1x10x128xf32> to vector<10x128xf32>
    %7 = arith.subf %6, %1 : vector<10x128xf32>
    %8 = arith.mulf %4, %4 : vector<10x128xf32>
    %9 = arith.mulf %7, %7 : vector<10x128xf32>
    %10 = arith.addf %8, %9 : vector<10x128xf32>
    %11 = vector.shape_cast %10 : vector<10x128xf32> to vector<1x10x128xf32>
    %cst = arith.constant dense<0.000000e+00> : vector<1xf32>
    %12 = vector.multi_reduction <add>, %11, %cst [1, 2] : vector<1x10x128xf32> to vector<1xf32>
    %13 = vector.shape_cast %12 : vector<1xf32> to vector<1x1x1xf32>
    %14 = vector.extract %13[0, 0, 0] : f32 from vector<1x1x1xf32>
    %c0_8 = arith.constant 0 : index
    %c0_9 = arith.constant 0 : index
    %c0_10 = arith.constant 0 : index
    %15 = vector.load %arg5[%c0_8, %c0_9, %c0_10] : memref<1x1x16xf32, #tpu.memory_space<vmem>>, vector<1x1x16xf32>
    %16 = vector.shape_cast %15 : vector<1x1x16xf32> to vector<1x16xf32>
    %c0_11 = arith.constant 0 : index
    %c0_12 = arith.constant 0 : index
    %c0_13 = arith.constant 0 : index
    %17 = vector.load %arg6[%c0_11, %c0_12, %c0_13] : memref<1x1x16xf32, #tpu.memory_space<vmem>>, vector<1x1x16xf32>
    %18 = vector.shape_cast %17 : vector<1x1x16xf32> to vector<1x16xf32>
    %cst_14 = arith.constant 0.000000e+00 : f32
    %19 = vector.broadcast %cst_14 : f32 to vector<1x16xf32>
    %20 = arith.maximumf %16, %19 : vector<1x16xf32>
    %21 = arith.mulf %16, %18 : vector<1x16xf32>
    %22 = arith.subf %20, %21 : vector<1x16xf32>
    %23 = math.absf %16 : vector<1x16xf32>
    %cst_15 = arith.constant 0.000000e+00 : f32
    %24 = vector.broadcast %cst_15 : f32 to vector<1x16xf32>
    %25 = arith.subf %24, %23 : vector<1x16xf32>
    %26 = math.exp %25 : vector<1x16xf32>
    %27 = math.log1p %26 : vector<1x16xf32>
    %28 = arith.addf %22, %27 : vector<1x16xf32>
    %29 = vector.shape_cast %28 : vector<1x16xf32> to vector<1x1x16xf32>
    %cst_16 = arith.constant dense<0.000000e+00> : vector<1xf32>
    %30 = vector.multi_reduction <add>, %29, %cst_16 [1, 2] : vector<1x1x16xf32> to vector<1xf32>
    %31 = vector.shape_cast %30 : vector<1xf32> to vector<1x1x1xf32>
    %32 = vector.extract %31[0, 0, 0] : f32 from vector<1x1x1xf32>
    %c0_17 = arith.constant 0 : index
    %c0_18 = arith.constant 0 : index
    %c0_19 = arith.constant 0 : index
    %33 = vector.load %arg7[%c0_17, %c0_18, %c0_19] : memref<1x1x128xf32, #tpu.memory_space<vmem>>, vector<1x1x128xf32>
    %34 = vector.shape_cast %33 : vector<1x1x128xf32> to vector<1x128xf32>
    %c0_20 = arith.constant 0 : index
    %c0_21 = arith.constant 0 : index
    %35 = vector.load %arg1[%c0_20, %c0_21] : memref<1x128xf32, #tpu.memory_space<vmem>>, vector<1x128xf32>
    %36 = arith.mulf %34, %35 : vector<1x128xf32>
    %37 = math.absf %36 : vector<1x128xf32>
    %38 = vector.shape_cast %37 : vector<1x128xf32> to vector<1x1x128xf32>
    %cst_22 = arith.constant dense<0.000000e+00> : vector<1xf32>
    %39 = vector.multi_reduction <add>, %38, %cst_22 [1, 2] : vector<1x1x128xf32> to vector<1xf32>
    %40 = vector.shape_cast %39 : vector<1xf32> to vector<1x1x1xf32>
    %41 = vector.extract %40[0, 0, 0] : f32 from vector<1x1x1xf32>
    %42 = arith.addf %14, %32 : f32
    %43 = vector.broadcast %42 : f32 to vector<8x128xf32>
    %c0_23 = arith.constant 0 : index
    %c0_24 = arith.constant 0 : index
    %c0_25 = arith.constant 0 : index
    %44 = vector.load %arg8[%c0_23, %c0_24, %c0_25] : memref<1x8x128xf32, #tpu.memory_space<vmem>>, vector<1x8x128xf32>
    %45 = vector.shape_cast %44 : vector<1x8x128xf32> to vector<8x128xf32>
    %46 = vector.shape_cast %43 : vector<8x128xf32> to vector<1x8x128xf32>
    tpu.vector_store %arg8[%c0_23, %c0_24, %c0_25], %46 {strides = array<i32>} : memref<1x8x128xf32, #tpu.memory_space<vmem>>, vector<1x8x128xf32>,
    %47 = vector.broadcast %41 : f32 to vector<8x128xf32>
    %c0_26 = arith.constant 0 : index
    %c0_27 = arith.constant 0 : index
    %c0_28 = arith.constant 0 : index
    %48 = vector.load %arg9[%c0_26, %c0_27, %c0_28] : memref<1x8x128xf32, #tpu.memory_space<vmem>>, vector<1x8x128xf32>
    %49 = vector.shape_cast %48 : vector<1x8x128xf32> to vector<8x128xf32>
    %50 = vector.shape_cast %47 : vector<8x128xf32> to vector<1x8x128xf32>
    tpu.vector_store %arg9[%c0_26, %c0_27, %c0_28], %50 {strides = array<i32>} : memref<1x8x128xf32, #tpu.memory_space<vmem>>, vector<1x8x128xf32>,
    return
  }
  func.func @transform_0(%arg0: i32) -> (i32, i32) {
    %c0_i32 = arith.constant 0 : i32
    %c0_i32_0 = arith.constant 0 : i32
    %c0_i32_1 = arith.constant 0 : i32
    return %c0_i32, %c0_i32_0 : i32, i32
  }
  func.func @transform_1(%arg0: i32) -> (i32, i32, i32) {
    %c0_i32 = arith.constant 0 : i32
    %c0_i32_0 = arith.constant 0 : i32
    %c0_i32_1 = arith.constant 0 : i32
    return %arg0, %c0_i32, %c0_i32_0 : i32, i32, i32
  }
  func.func @transform_2(%arg0: i32) -> (i32, i32, i32) {
    %c0_i32 = arith.constant 0 : i32
    %c0_i32_0 = arith.constant 0 : i32
    %c0_i32_1 = arith.constant 0 : i32
    return %arg0, %c0_i32, %c0_i32_0 : i32, i32, i32
  }
  func.func @transform_3(%arg0: i32) -> (i32, i32, i32) {
    %c0_i32 = arith.constant 0 : i32
    %c0_i32_0 = arith.constant 0 : i32
    %c0_i32_1 = arith.constant 0 : i32
    return %arg0, %c0_i32, %c0_i32_0 : i32, i32, i32
  }
  func.func @transform_4(%arg0: i32) -> (i32, i32, i32) {
    %c0_i32 = arith.constant 0 : i32
    %c0_i32_0 = arith.constant 0 : i32
    %c0_i32_1 = arith.constant 0 : i32
    return %arg0, %c0_i32, %c0_i32_0 : i32, i32, i32
  }
  func.func @transform_5(%arg0: i32) -> (i32, i32, i32) {
    %c0_i32 = arith.constant 0 : i32
    %c0_i32_0 = arith.constant 0 : i32
    %c0_i32_1 = arith.constant 0 : i32
    return %arg0, %c0_i32, %c0_i32_0 : i32, i32, i32
  }
  func.func @transform_6(%arg0: i32) -> (i32, i32, i32) {
    %c0_i32 = arith.constant 0 : i32
    %c0_i32_0 = arith.constant 0 : i32
    %c0_i32_1 = arith.constant 0 : i32
    return %arg0, %c0_i32, %c0_i32_0 : i32, i32, i32
  }
  func.func @transform_7(%arg0: i32) -> (i32, i32, i32) {
    %c0_i32 = arith.constant 0 : i32
    %c0_i32_0 = arith.constant 0 : i32
    %c0_i32_1 = arith.constant 0 : i32
    return %arg0, %c0_i32, %c0_i32_0 : i32, i32, i32
  }
  func.func @transform_8(%arg0: i32) -> (i32, i32, i32) {
    %c0_i32 = arith.constant 0 : i32
    %c0_i32_0 = arith.constant 0 : i32
    %c0_i32_1 = arith.constant 0 : i32
    return %arg0, %c0_i32, %c0_i32_0 : i32, i32, i32
  }
}

</mosaic_0001>

<llo_original>
// kernel: tacotron2_loss.1
$region0: #{tacotron2_loss.1}
  #allocation0 [shape = 'u32[]', space=smem, size = 0x4, offset = 0x4, fixed_abs, tag = 'smem constant byte address 0x4 - core index']
  #allocation1 [shape = 'u32[144,128]{1,0:T(1,128)}', space=vmem, size = 0x12000, scoped, tag = 'internal scratch']
  %s0 = inlined_call_operand.vmem [shape: f32[1,128], index: 0, kind: input, shape index: {}]
  %s1 = inlined_call_operand.vmem [shape: f32[2,10,128], index: 1, kind: input, shape index: {}]
  %s2 = inlined_call_operand.vmem [shape: f32[2,10,128], index: 2, kind: input, shape index: {}]
  %s3 = inlined_call_operand.vmem [shape: f32[2,10,128], index: 3, kind: input, shape index: {}]
  %s4 = inlined_call_operand.vmem [shape: f32[2,1,16], index: 4, kind: input, shape index: {}]
  %s5 = inlined_call_operand.vmem [shape: f32[2,1,16], index: 5, kind: input, shape index: {}]
  %s6 = inlined_call_operand.vmem [shape: f32[2,1,128], index: 6, kind: input, shape index: {}]
  %s7 = inlined_call_operand.vmem [shape: f32[2,8,128], index: 7, kind: output, shape index: {0}]
  %s8 = inlined_call_operand.vmem [shape: f32[2,8,128], index: 8, kind: output, shape index: {1}]
  %9 = xla_tuple %s7, %s8
  %s10 = sld [smem:[#allocation0]]
  $region69: #{tacotron2_loss.1} parent=0
    _
  %s12 = ssub.s32 1, %s10
  %s13 = scalar_select 0, %s12, %s10
  loop: start=0, step=1, limit=4
  $region2: #{tacotron2_loss.1} parent=0 // loop_pre_header
    _
  $region3: #{tacotron2_loss.1} parent=0 // loop_header
    %s15 = sphi 0, %s19
    %p16 = scmp.ge.s32.totalorder %s15, 4
    %s23 = sphi 0, %s23
    %s25 = sphi 0, %s23
    %s26 = sphi 0, %s25
    %s40 = sphi 0, %s26
    %s46 = sphi 0, %s48
    %s49 = sphi 0, %s46
    %s50 = sphi 0, %s49
    %s66 = sphi 0, %s50
    %s72 = sphi 0, %s74
    %s75 = sphi 0, %s72
    %s76 = sphi 0, %s75
    %s92 = sphi 0, %s76
    %s98 = sphi 0, %s100
    %s101 = sphi 0, %s98
    %s102 = sphi 0, %s101
    %s118 = sphi 0, %s102
    %s124 = sphi 0, %s126
    %s127 = sphi 0, %s124
    %s128 = sphi 0, %s127
    %s144 = sphi 0, %s128
    %s150 = sphi 0, %s152
    %s153 = sphi 0, %s150
    %s154 = sphi 0, %s153
    %s170 = sphi 0, %s154
    %s176 = sphi 0, %s178
    %s179 = sphi 0, %s176
    %s180 = sphi 0, %s179
    %s196 = sphi 0, %s180
    %s202 = sphi 0, %s204
    %s205 = sphi 0, %s202
    %s206 = sphi 0, %s205
    %s222 = sphi 0, %s206
    %s228 = sphi 0, %s230
    %s231 = sphi 0, %s228
    %s232 = sphi 0, %s231
    %s248 = sphi 0, %s232
  $region4: #{tacotron2_loss.1} parent=0 // loop_header_branch
    %18 = sbr.rel (%p16) target = $region8
  $region5: #{tacotron2_loss.1} parent=0 // loop_body
    %s20 = ssub.s32 %s15, 1
    %s21 = ssub.s32 %s15, 2
    %s22 = sadd.s32 %s15, 1
    %s24 = sadd.s32 %s23, 1
    %p27 = scmp.eq.s32.totalorder %s15, 1
    %p28 = scmp.ne.s32.totalorder %s23, %s25
    %p29 = scmp.eq.s32.totalorder %s15, 0
    %p30 = por %p28, %p29
    %p31 = scmp.ne.s32.totalorder %s23, %s25
    %p32 = scmp.eq.s32.totalorder %s20, 1
    %p33 = por %p31, %p32
    %p34 = scmp.ne.s32.totalorder %s25, %s26
    %p35 = scmp.eq.s32.totalorder %s20, 0
    %p36 = por %p34, %p35
    %p37 = scmp.ne.s32.totalorder %s25, %s26
    %p38 = scmp.eq.s32.totalorder %s21, 1
    %p39 = por %p37, %p38
    %p41 = scmp.ne.s32.totalorder %s26, %s40
    %p42 = scmp.eq.s32.totalorder %s21, 0
    %p43 = por %p41, %p42
    %s44 = ssub.s32 %s15, %s22
    %p45 = scmp.eq.s32.totalorder %s44, 0
    %s47 = sadd.s32 %s46, 1
    %s48 = scalar_select %p45, %s46, %s47
    %p51 = pneg %p45
    %p52 = scmp.eq.s32.totalorder %s15, 1
    %p53 = por %p51, %p52
    %p54 = scmp.ne.s32.totalorder %s46, %s49
    %p55 = scmp.eq.s32.totalorder %s15, 0
    %p56 = por %p54, %p55
    %p57 = scmp.ne.s32.totalorder %s46, %s49
    %p58 = scmp.eq.s32.totalorder %s20, 1
    %p59 = por %p57, %p58
    %p60 = scmp.ne.s32.totalorder %s49, %s50
    %p61 = scmp.eq.s32.totalorder %s20, 0
    %p62 = por %p60, %p61
    %p63 = scmp.ne.s32.totalorder %s49, %s50
    %p64 = scmp.eq.s32.totalorder %s21, 1
    %p65 = por %p63, %p64
    %p67 = scmp.ne.s32.totalorder %s50, %s66
    %p68 = scmp.eq.s32.totalorder %s21, 0
    %p69 = por %p67, %p68
    %s70 = ssub.s32 %s15, %s22
    %p71 = scmp.eq.s32.totalorder %s70, 0
    %s73 = sadd.s32 %s72, 1
    %s74 = scalar_select %p71, %s72, %s73
    %p77 = pneg %p71
    %p78 = scmp.eq.s32.totalorder %s15, 1
    %p79 = por %p77, %p78
    %p80 = scmp.ne.s32.totalorder %s72, %s75
    %p81 = scmp.eq.s32.totalorder %s15, 0
    %p82 = por %p80, %p81
    %p83 = scmp.ne.s32.totalorder %s72, %s75
    %p84 = scmp.eq.s32.totalorder %s20, 1
    %p85 = por %p83, %p84
    %p86 = scmp.ne.s32.totalorder %s75, %s76
    %p87 = scmp.eq.s32.totalorder %s20, 0
    %p88 = por %p86, %p87
    %p89 = scmp.ne.s32.totalorder %s75, %s76
    %p90 = scmp.eq.s32.totalorder %s21, 1
    %p91 = por %p89, %p90
    %p93 = scmp.ne.s32.totalorder %s76, %s92
    %p94 = scmp.eq.s32.totalorder %s21, 0
    %p95 = por %p93, %p94
    %s96 = ssub.s32 %s15, %s22
    %p97 = scmp.eq.s32.totalorder %s96, 0
    %s99 = sadd.s32 %s98, 1
    %s100 = scalar_select %p97, %s98, %s99
    %p103 = pneg %p97
    %p104 = scmp.eq.s32.totalorder %s15, 1
    %p105 = por %p103, %p104
    %p106 = scmp.ne.s32.totalorder %s98, %s101
    %p107 = scmp.eq.s32.totalorder %s15, 0
    %p108 = por %p106, %p107
    %p109 = scmp.ne.s32.totalorder %s98, %s101
    %p110 = scmp.eq.s32.totalorder %s20, 1
    %p111 = por %p109, %p110
    %p112 = scmp.ne.s32.totalorder %s101, %s102
    %p113 = scmp.eq.s32.totalorder %s20, 0
    %p114 = por %p112, %p113
    %p115 = scmp.ne.s32.totalorder %s101, %s102
    %p116 = scmp.eq.s32.totalorder %s21, 1
    %p117 = por %p115, %p116
    %p119 = scmp.ne.s32.totalorder %s102, %s118
    %p120 = scmp.eq.s32.totalorder %s21, 0
    %p121 = por %p119, %p120
    %s122 = ssub.s32 %s15, %s22
    %p123 = scmp.eq.s32.totalorder %s122, 0
    %s125 = sadd.s32 %s124, 1
    %s126 = scalar_select %p123, %s124, %s125
    %p129 = pneg %p123
    %p130 = scmp.eq.s32.totalorder %s15, 1
    %p131 = por %p129, %p130
    %p132 = scmp.ne.s32.totalorder %s124, %s127
    %p133 = scmp.eq.s32.totalorder %s15, 0
    %p134 = por %p132, %p133
    %p135 = scmp.ne.s32.totalorder %s124, %s127
    %p136 = scmp.eq.s32.totalorder %s20, 1
    %p137 = por %p135, %p136
    %p138 = scmp.ne.s32.totalorder %s127, %s128
    %p139 = scmp.eq.s32.totalorder %s20, 0
    %p140 = por %p138, %p139
    %p141 = scmp.ne.s32.totalorder %s127, %s128
    %p142 = scmp.eq.s32.totalorder %s21, 1
    %p143 = por %p141, %p142
    %p145 = scmp.ne.s32.totalorder %s128, %s144
    %p146 = scmp.eq.s32.totalorder %s21, 0
    %p147 = por %p145, %p146
    %s148 = ssub.s32 %s15, %s22
    %p149 = scmp.eq.s32.totalorder %s148, 0
    %s151 = sadd.s32 %s150, 1
    %s152 = scalar_select %p149, %s150, %s151
    %p155 = pneg %p149
    %p156 = scmp.eq.s32.totalorder %s15, 1
    %p157 = por %p155, %p156
    %p158 = scmp.ne.s32.totalorder %s150, %s153
    %p159 = scmp.eq.s32.totalorder %s15, 0
    %p160 = por %p158, %p159
    %p161 = scmp.ne.s32.totalorder %s150, %s153
    %p162 = scmp.eq.s32.totalorder %s20, 1
    %p163 = por %p161, %p162
    %p164 = scmp.ne.s32.totalorder %s153, %s154
    %p165 = scmp.eq.s32.totalorder %s20, 0
    %p166 = por %p164, %p165
    %p167 = scmp.ne.s32.totalorder %s153, %s154
    %p168 = scmp.eq.s32.totalorder %s21, 1
    %p169 = por %p167, %p168
    %p171 = scmp.ne.s32.totalorder %s154, %s170
    %p172 = scmp.eq.s32.totalorder %s21, 0
    %p173 = por %p171, %p172
    %s174 = ssub.s32 %s15, %s22
    %p175 = scmp.eq.s32.totalorder %s174, 0
    %s177 = sadd.s32 %s176, 1
    %s178 = scalar_select %p175, %s176, %s177
    %p181 = pneg %p175
    %p182 = scmp.eq.s32.totalorder %s15, 1
    %p183 = por %p181, %p182
    %p184 = scmp.ne.s32.totalorder %s176, %s179
    %p185 = scmp.eq.s32.totalorder %s15, 0
    %p186 = por %p184, %p185
    %p187 = scmp.ne.s32.totalorder %s176, %s179
    %p188 = scmp.eq.s32.totalorder %s20, 1
    %p189 = por %p187, %p188
    %p190 = scmp.ne.s32.totalorder %s179, %s180
    %p191 = scmp.eq.s32.totalorder %s20, 0
    %p192 = por %p190, %p191
    %p193 = scmp.ne.s32.totalorder %s179, %s180
    %p194 = scmp.eq.s32.totalorder %s21, 1
    %p195 = por %p193, %p194
    %p197 = scmp.ne.s32.totalorder %s180, %s196
    %p198 = scmp.eq.s32.totalorder %s21, 0
    %p199 = por %p197, %p198
    %s200 = ssub.s32 %s15, %s22
    %p201 = scmp.eq.s32.totalorder %s200, 0
    %s203 = sadd.s32 %s202, 1
    %s204 = scalar_select %p201, %s202, %s203
    %p207 = pneg %p201
    %p208 = scmp.eq.s32.totalorder %s15, 1
    %p209 = por %p207, %p208
    %p210 = scmp.ne.s32.totalorder %s202, %s205
    %p211 = scmp.eq.s32.totalorder %s15, 0
    %p212 = por %p210, %p211
    %p213 = scmp.ne.s32.totalorder %s202, %s205
    %p214 = scmp.eq.s32.totalorder %s20, 1
    %p215 = por %p213, %p214
    %p216 = scmp.ne.s32.totalorder %s205, %s206
    %p217 = scmp.eq.s32.totalorder %s20, 0
    %p218 = por %p216, %p217
    %p219 = scmp.ne.s32.totalorder %s205, %s206
    %p220 = scmp.eq.s32.totalorder %s21, 1
    %p221 = por %p219, %p220
    %p223 = scmp.ne.s32.totalorder %s206, %s222
    %p224 = scmp.eq.s32.totalorder %s21, 0
    %p225 = por %p223, %p224
    %s226 = ssub.s32 %s15, %s22
    %p227 = scmp.eq.s32.totalorder %s226, 0
    %s229 = sadd.s32 %s228, 1
    %s230 = scalar_select %p227, %s228, %s229
    %p233 = pneg %p227
    %p234 = scmp.eq.s32.totalorder %s15, 1
    %p235 = por %p233, %p234
    %p236 = scmp.ne.s32.totalorder %s228, %s231
    %p237 = scmp.eq.s32.totalorder %s15, 0
    %p238 = por %p236, %p237
    %p239 = scmp.ne.s32.totalorder %s228, %s231
    %p240 = scmp.eq.s32.totalorder %s20, 1
    %p241 = por %p239, %p240
    %p242 = scmp.ne.s32.totalorder %s231, %s232
    %p243 = scmp.eq.s32.totalorder %s20, 0
    %p244 = por %p242, %p243
    %p245 = scmp.ne.s32.totalorder %s231, %s232
    %p246 = scmp.eq.s32.totalorder %s21, 1
    %p247 = por %p245, %p246
    %p249 = scmp.ne.s32.totalorder %s232, %s248
    %p250 = scmp.eq.s32.totalorder %s21, 0
    %p251 = por %p249, %p250
    %p252 = scmp.le.s32.totalorder 1, %s15
    %p253 = scmp.lt.s32.totalorder %s15, 3
    %p254 = pnand %p252, %p253
    %p255 = pneg %p254
    // Predicated region
    $region9: #{tacotron2_loss.1} parent=5 // pred_check
      _
    $region10: #{tacotron2_loss.1} parent=5 // pred_check_branch
      %257 = sbr.rel (%p254) target = $region12
    $region11: #{tacotron2_loss.1} parent=5 // pred_region
      %s258 = ssub.s32 %s15, 1
      // Predicated region
      $region13: #{tacotron2_loss.1} parent=11 // pred_check
        %p259 = pneg %p36
      $region14: #{tacotron2_loss.1} parent=11 // pred_check_branch
        %261 = sbr.rel (%p259) target = $region16
      $region15: #{tacotron2_loss.1} parent=11 // pred_region
        _
      $region16: #{tacotron2_loss.1} parent=11 // pred_fallthru
        _
    $region12: #{tacotron2_loss.1} parent=5 // pred_fallthru
      _
    %p262 = scmp.lt.s32.totalorder %s15, 2
    // Predicated region
    $region17: #{tacotron2_loss.1} parent=5 // pred_check
      %p263 = pneg %p262
    $region18: #{tacotron2_loss.1} parent=5 // pred_check_branch
      %265 = sbr.rel (%p263) target = $region20
    $region19: #{tacotron2_loss.1} parent=5 // pred_region
      // Predicated region
      $region21: #{tacotron2_loss.1} parent=19 // pred_check
        %p266 = pneg %p56
      $region22: #{tacotron2_loss.1} parent=19 // pred_check_branch
        %268 = sbr.rel (%p266) target = $region24
      $region23: #{tacotron2_loss.1} parent=19 // pred_region
        %p269 = scmp.lt.s32.totalorder %s15, 1
        %s270 = scalar_select %p269, %s15, 1
        %s271 = smul.addr %s270, 2
        %s272 = smul.addr %s271, 8
        %s273 = scalar_lea.vmem %s1, %s272
      $region24: #{tacotron2_loss.1} parent=19 // pred_fallthru
        _
      // Predicated region
      $region25: #{tacotron2_loss.1} parent=19 // pred_check
        %p274 = pneg %p82
      $region26: #{tacotron2_loss.1} parent=19 // pred_check_branch
        %276 = sbr.rel (%p274) target = $region28
      $region27: #{tacotron2_loss.1} parent=19 // pred_region
        %p277 = scmp.lt.s32.totalorder %s15, 1
        %s278 = scalar_select %p277, %s15, 1
        %s279 = smul.addr %s278, 2
        %s280 = smul.addr %s279, 8
        %s281 = scalar_lea.vmem %s2, %s280
      $region28: #{tacotron2_loss.1} parent=19 // pred_fallthru
        _
      // Predicated region
      $region29: #{tacotron2_loss.1} parent=19 // pred_check
        %p282 = pneg %p108
      $region30: #{tacotron2_loss.1} parent=19 // pred_check_branch
        %284 = sbr.rel (%p282) target = $region32
      $region31: #{tacotron2_loss.1} parent=19 // pred_region
        %p285 = scmp.lt.s32.totalorder %s15, 1
        %s286 = scalar_select %p285, %s15, 1
        %s287 = smul.addr %s286, 2
        %s288 = smul.addr %s287, 8
        %s289 = scalar_lea.vmem %s3, %s288
      $region32: #{tacotron2_loss.1} parent=19 // pred_fallthru
        _
      // Predicated region
      $region33: #{tacotron2_loss.1} parent=19 // pred_check
        %p290 = pneg %p134
      $region34: #{tacotron2_loss.1} parent=19 // pred_check_branch
        %292 = sbr.rel (%p290) target = $region36
      $region35: #{tacotron2_loss.1} parent=19 // pred_region
        %p293 = scmp.lt.s32.totalorder %s15, 1
        %s294 = scalar_select %p293, %s15, 1
        %s295 = scalar_lea.vmem %s4, %s294
      $region36: #{tacotron2_loss.1} parent=19 // pred_fallthru
        _
      // Predicated region
      $region37: #{tacotron2_loss.1} parent=19 // pred_check
        %p296 = pneg %p160
      $region38: #{tacotron2_loss.1} parent=19 // pred_check_branch
        %298 = sbr.rel (%p296) target = $region40
      $region39: #{tacotron2_loss.1} parent=19 // pred_region
        %p299 = scmp.lt.s32.totalorder %s15, 1
        %s300 = scalar_select %p299, %s15, 1
        %s301 = scalar_lea.vmem %s5, %s300
      $region40: #{tacotron2_loss.1} parent=19 // pred_fallthru
        _
      // Predicated region
      $region41: #{tacotron2_loss.1} parent=19 // pred_check
        %p302 = pneg %p186
      $region42: #{tacotron2_loss.1} parent=19 // pred_check_branch
        %304 = sbr.rel (%p302) target = $region44
      $region43: #{tacotron2_loss.1} parent=19 // pred_region
        %p305 = scmp.lt.s32.totalorder %s15, 1
        %s306 = scalar_select %p305, %s15, 1
        %s307 = scalar_lea.vmem %s6, %s306
      $region44: #{tacotron2_loss.1} parent=19 // pred_fallthru
        _
    $region20: #{tacotron2_loss.1} parent=5 // pred_fallthru
      _
    %p308 = scmp.le.s32.totalorder 1, %s15
    %p309 = scmp.lt.s32.totalorder %s15, 3
    %p310 = pnand %p308, %p309
    %p311 = pneg %p310
    // Predicated region
    $region45: #{tacotron2_loss.1} parent=5 // pred_check
      _
    $region46: #{tacotron2_loss.1} parent=5 // pred_check_branch
      %313 = sbr.rel (%p310) target = $region48
    $region47: #{tacotron2_loss.1} parent=5 // pred_region
      %s314 = ssub.s32 %s15, 1
      %p315 = pneg %p36
      %p316 = pneg %p33
      %p317 = scmp.lt.s32.totalorder %s20, 1
      %s318 = scalar_select %p317, %s20, 1
      %s319 = smul.addr %s318, 2
      %s320 = smul.addr %s319, 8
      %s321 = scalar_lea.vmem %s1, %s320
      %p322 = pneg %p62
      %p323 = pneg %p59
      %p324 = scmp.lt.s32.totalorder %s20, 1
      %s325 = scalar_select %p324, %s20, 1
      %s326 = smul.addr %s325, 2
      %s327 = smul.addr %s326, 8
      %s328 = scalar_lea.vmem %s2, %s327
      %p329 = pneg %p88
      %p330 = pneg %p85
      %p331 = scmp.lt.s32.totalorder %s20, 1
      %s332 = scalar_select %p331, %s20, 1
      %s333 = smul.addr %s332, 2
      %s334 = smul.addr %s333, 8
      %s335 = scalar_lea.vmem %s3, %s334
      %p336 = pneg %p114
      %p337 = pneg %p111
      %p338 = scmp.lt.s32.totalorder %s20, 1
      %s339 = scalar_select %p338, %s20, 1
      %s340 = scalar_lea.vmem %s4, %s339
      %p341 = pneg %p140
      %p342 = pneg %p137
      %p343 = scmp.lt.s32.totalorder %s20, 1
      %s344 = scalar_select %p343, %s20, 1
      %s345 = scalar_lea.vmem %s5, %s344
      %p346 = pneg %p166
      %p347 = pneg %p163
      %p348 = scmp.lt.s32.totalorder %s20, 1
      %s349 = scalar_select %p348, %s20, 1
      %s350 = scalar_lea.vmem %s6, %s349
      %p351 = pneg %p192
      %p352 = pneg %p189
      %p353 = pneg %p218
      %p354 = pneg %p215
      %p355 = scmp.lt.s32.totalorder %s20, 1
      %s356 = scalar_select %p355, %s20, 1
      %s357 = smul.addr %s356, 8
      %s358 = scalar_lea.vmem %s7, %s357
      %p359 = pneg %p244
      %p360 = pneg %p241
      %p361 = scmp.lt.s32.totalorder %s20, 1
      %s362 = scalar_select %p361, %s20, 1
      %s363 = smul.addr %s362, 8
      %s364 = scalar_lea.vmem %s8, %s363
      %p365 = scmp.lt.s32.totalorder %s20, 1
      %s366 = scalar_select %p365, %s20, 1
      %s367 = smul.addr %s366, 2
      %s368 = smul.addr %s367, 8
      %s369 = scalar_lea.vmem %s1, %s368
      %p370 = scmp.lt.s32.totalorder %s20, 1
      %s371 = scalar_select %p370, %s20, 1
      %s372 = smul.addr %s371, 2
      %s373 = smul.addr %s372, 8
      %s374 = scalar_lea.vmem %s2, %s373
      %p375 = scmp.lt.s32.totalorder %s20, 1
      %s376 = scalar_select %p375, %s20, 1
      %s377 = smul.addr %s376, 2
      %s378 = smul.addr %s377, 8
      %s379 = scalar_lea.vmem %s3, %s378
      %p380 = scmp.lt.s32.totalorder %s20, 1
      %s381 = scalar_select %p380, %s20, 1
      %s382 = scalar_lea.vmem %s4, %s381
      %p383 = scmp.lt.s32.totalorder %s20, 1
      %s384 = scalar_select %p383, %s20, 1
      %s385 = scalar_lea.vmem %s5, %s384
      %p386 = scmp.lt.s32.totalorder %s20, 1
      %s387 = scalar_select %p386, %s20, 1
      %s388 = scalar_lea.vmem %s6, %s387
      %p389 = scmp.lt.s32.totalorder %s20, 1
      %s390 = scalar_select %p389, %s20, 1
      %s391 = smul.addr %s390, 8
      %s392 = scalar_lea.vmem %s7, %s391
      %p393 = scmp.lt.s32.totalorder %s20, 1
      %s394 = scalar_select %p393, %s20, 1
      %s395 = smul.addr %s394, 8
      %s396 = scalar_lea.vmem %s8, %s395
      %v397 = vld [vmem:[%s379] sm:$0xff]
      %v398 = vld [vmem:[%s379 + $0x8] sm:$0x3]
      %v399 = vld [vmem:[%s369] sm:$0xff]
      %v400 = vld [vmem:[%s369 + $0x8] sm:$0x3]
      %v401 = vsub.f32 %v399, %v397
      %v402 = vsub.f32 %v400, %v398
      %v403 = vld [vmem:[%s374] sm:$0xff]
      %v404 = vld [vmem:[%s374 + $0x8] sm:$0x3]
      %v405 = vsub.f32 %v403, %v397
      %v406 = vsub.f32 %v404, %v398
      %v407 = vmul.f32 %v401, %v401
      %v408 = vmul.f32 %v402, %v402
      %v409 = vmul.f32 %v405, %v405
      %v410 = vmul.f32 %v406, %v406
      %v411 = vadd.f32 %v407, %v409
      %v412 = vadd.f32 %v408, %v410
      %vm413 = vcmask 1041408
      %v414 = vsel %vm413, %v412, 0.0
      %v415 = vadd.f32 %v411, %v414
      %416 = vadd.xlane.f32.xlu0 %v415
      %v417 = vpop.xlane.xlu0 %416
      %v418 = vrot.slane %v417, 4
      %v419 = vadd.f32 %v417, %v418
      %v420 = vrot.slane %v419, 2
      %v421 = vadd.f32 %v419, %v420
      %v422 = vrot.slane %v421, 1
      %v423 = vadd.f32 %v421, %v422
      %s424 = vtos %v423
      %v425 = vld [vmem:[%s382] sm:$0x1]
      %v426 = vld [vmem:[%s385] sm:$0x1]
      %v427 = vmax.f32 %v425, 0.0
      %v428 = vmul.f32 %v425, %v426
      %v429 = vsub.f32 %v427, %v428
      %v430 = vand.u32 2147483647, %v425
      %v431 = vsub.f32 0.0, %v430
      %v432 = vmul.f32 %v431, 1.442695
      %v433 = vpow.pop %v432
      %v434 = vadd.f32 %v433, 1.0
      %v435 = vlog2.pop %v434
      %v436 = vmul.f32 %v435, 0.6931472
      %v437 = vmul.f32 -0.5, %v433
      %v438 = vadd.f32 %v437, 1.0
      %v439 = vmul.f32 %v438, %v433
      %v440 = vand.u32 2147483647, %v433
      %vm441 = vcmp.lt.f32.partialorder %v440, 0.0004427343
      %v442 = vsel %vm441, %v439, %v436
      %v443 = vadd.f32 %v429, %v442
      %vm444 = vcmask 122880
      %v445 = vsel %vm444, %v443, 0.0
      %446 = vadd.xlane.f32.xlu0 %v445
      %v447 = vpop.xlane.xlu0 %446
      %v448 = vrot.slane %v447, 4
      %v449 = vadd.f32 %v447, %v448
      %v450 = vrot.slane %v449, 2
      %v451 = vadd.f32 %v449, %v450
      %v452 = vrot.slane %v451, 1
      %v453 = vadd.f32 %v451, %v452
      %s454 = vtos %v453
      %v455 = vld [vmem:[%s388] sm:$0x1]
      %v456 = vld [vmem:[%s0] sm:$0x1]
      %v457 = vmul.f32 %v455, %v456
      %v458 = vand.u32 2147483647, %v457
      %vm459 = vcmask 1040384
      %v460 = vsel %vm459, %v458, 0.0
      %461 = vadd.xlane.f32.xlu0 %v460
      %v462 = vpop.xlane.xlu0 %461
      %v463 = vrot.slane %v462, 4
      %v464 = vadd.f32 %v462, %v463
      %v465 = vrot.slane %v464, 2
      %v466 = vadd.f32 %v464, %v465
      %v467 = vrot.slane %v466, 1
      %v468 = vadd.f32 %v466, %v467
      %s469 = vtos %v468
      %s470 = sadd.f32 %s424, %s454
      %v471 = vstv %s470
      %472 = vst [vmem:[%s392] sm:$0xff] %v471
      %v473 = vstv %s469
      %474 = vst [vmem:[%s396] sm:$0xff] %v473
      %p475 = scmp.lt.s32.totalorder %s20, 1
      %s476 = scalar_select %p475, %s20, 1
      %s477 = smul.addr %s476, 8
      %s478 = scalar_lea.vmem %s7, %s477
      %p479 = scmp.lt.s32.totalorder %s20, 1
      %s480 = scalar_select %p479, %s20, 1
      %s481 = smul.addr %s480, 8
      %s482 = scalar_lea.vmem %s8, %s481
      // Predicated region
      $region49: #{tacotron2_loss.1} parent=47 // pred_check
        %p483 = pneg %p215
      $region50: #{tacotron2_loss.1} parent=47 // pred_check_branch
        %485 = sbr.rel (%p483) target = $region52
      $region51: #{tacotron2_loss.1} parent=47 // pred_region
        _
      $region52: #{tacotron2_loss.1} parent=47 // pred_fallthru
        _
      // Predicated region
      $region53: #{tacotron2_loss.1} parent=47 // pred_check
        %p486 = pneg %p241
      $region54: #{tacotron2_loss.1} parent=47 // pred_check_branch
        %488 = sbr.rel (%p486) target = $region56
      $region55: #{tacotron2_loss.1} parent=47 // pred_region
        _
      $region56: #{tacotron2_loss.1} parent=47 // pred_fallthru
        _
    $region48: #{tacotron2_loss.1} parent=5 // pred_fallthru
      _
    %p489 = scmp.le.s32.totalorder 2, %s15
    // Predicated region
    $region57: #{tacotron2_loss.1} parent=5 // pred_check
      %p490 = pneg %p489
    $region58: #{tacotron2_loss.1} parent=5 // pred_check_branch
      %492 = sbr.rel (%p490) target = $region60
    $region59: #{tacotron2_loss.1} parent=5 // pred_region
      %s493 = ssub.s32 %s15, 2
      // Predicated region
      $region61: #{tacotron2_loss.1} parent=59 // pred_check
        %p494 = pneg %p221
      $region62: #{tacotron2_loss.1} parent=59 // pred_check_branch
        %496 = sbr.rel (%p494) target = $region64
      $region63: #{tacotron2_loss.1} parent=59 // pred_region
        %p497 = scmp.lt.s32.totalorder %s21, 1
        %s498 = scalar_select %p497, %s21, 1
        %s499 = smul.addr %s498, 8
        %s500 = scalar_lea.vmem %s7, %s499
      $region64: #{tacotron2_loss.1} parent=59 // pred_fallthru
        _
      // Predicated region
      $region65: #{tacotron2_loss.1} parent=59 // pred_check
        %p501 = pneg %p247
      $region66: #{tacotron2_loss.1} parent=59 // pred_check_branch
        %503 = sbr.rel (%p501) target = $region68
      $region67: #{tacotron2_loss.1} parent=59 // pred_region
        %p504 = scmp.lt.s32.totalorder %s21, 1
        %s505 = scalar_select %p504, %s21, 1
        %s506 = smul.addr %s505, 8
        %s507 = scalar_lea.vmem %s8, %s506
      $region68: #{tacotron2_loss.1} parent=59 // pred_fallthru
        _
    $region60: #{tacotron2_loss.1} parent=5 // pred_fallthru
      _
  $region6: #{tacotron2_loss.1} parent=0 // loop_footer
    %s19 = sadd.s32 1, %s15
  $region7: #{tacotron2_loss.1} parent=0 // loop_footer_branch
    %14 = sbr.rel target = $region3
  $region8: #{tacotron2_loss.1} parent=0 // loop_exit
    _

</llo_original>
